<compile_context>
chip_gen: v7x
topology: tpu7x:2x2x1
jax: 0.10.0
libtpu: 0.0.40
codegen_flags: <defaults>
</compile_context>

<pallas_src>
import jax
import jax.numpy as jnp
from jax.experimental import pallas as pl
from jax.experimental.pallas import tpu as pltpu


def _mul_conv1x1_kernel(s_ref, w_ref, x_ref, o_ref):
    # s_ref: (1, Cin)     channel gate row
    # w_ref: (Cout, Cin)  1x1 conv weight (resident)
    # x_ref: (Cin, tn)    channels-major activation tile (lanes = spatial)
    # o_ref: (Cout, tn)   channels-major output tile (lane-dense stores)
    #
    # Fold the gate into the tiny weight (Cout*Cin = ~14K elems) instead of
    # scaling the full activation tile each step.
    wg = w_ref[...] * s_ref[...]                      # (Cout, Cin)
    o_ref[...] = jnp.dot(
        wg, x_ref[...], preferred_element_type=jnp.float32
    ).astype(o_ref.dtype)


def mul_conv1x1(x_nchw, scale_nc11, weight_oihw, *, tn=None):
    """x_nchw: [1, Cin, H, W], scale_nc11: [1, Cin, 1, 1],
    weight_oihw: [Cout, Cin, 1, 1]. Returns [1, Cout, H, W]."""
    N, Cin, H, W = x_nchw.shape
    Cout = weight_oihw.shape[0]
    assert N == 1, "module was traced with batch 1"
    M = H * W

    # Free reshapes: NCHW with N=1 is already channels-major in memory.
    x_cm = x_nchw.reshape(Cin, M)            # (Cin, M)
    s_row = scale_nc11.reshape(1, Cin)       # (1, Cin)
    w_mat = weight_oihw.reshape(Cout, Cin)   # (Cout, Cin)

    if tn is None:
        # Single grid step when the (double-buffered) working set is small;
        # otherwise 512-lane tiles (multiple of 128 -> lane-dense, Pallas
        # masks the trailing partial tile via cdiv grid).
        working = 2 * (Cin + Cout) * M * x_nchw.dtype.itemsize
        tn = M if working <= (16 << 20) else 512

    grid = (pl.cdiv(M, tn),)

    out_cm = pl.pallas_call(
        _mul_conv1x1_kernel,
        out_shape=jax.ShapeDtypeStruct((Cout, M), x_nchw.dtype),
        grid_spec=pltpu.PrefetchScalarGridSpec(
            num_scalar_prefetch=0,
            grid=grid,
            in_specs=[
                pl.BlockSpec((1, Cin), lambda i: (0, 0)),      # gate (resident)
                pl.BlockSpec((Cout, Cin), lambda i: (0, 0)),   # weight (resident)
                pl.BlockSpec((Cin, tn), lambda i: (0, i)),     # activation tile
            ],
            out_specs=pl.BlockSpec((Cout, tn), lambda i: (0, i)),
        ),
        compiler_params=pltpu.CompilerParams(
            dimension_semantics=("parallel",),
        ),
    )(s_row, w_mat, x_cm)

    # Free reshape back to NCHW.
    return out_cm.reshape(N, Cout, H, W)


if __name__ == "__main__":
    # Channel counts fixed by the module (288 -> 48); spatial kept small.
    N, Cin, H, W = 1, 288, 16, 16
    Cout = 48

    key = jax.random.PRNGKey(0)
    kx, ks, kw = jax.random.split(key, 3)
    x134 = jax.random.normal(kx, (N, Cin, H, W), dtype=jnp.float32)
    x139 = jax.random.normal(ks, (N, Cin, 1, 1), dtype=jnp.float32)
    # Deterministic Conv2d weight (kaiming-ish scale), shape [Cout, Cin, 1, 1]
    weight = jax.random.normal(kw, (Cout, Cin, 1, 1), dtype=jnp.float32) * (
        1.0 / jnp.sqrt(Cin)
    )

    out = mul_conv1x1(x134, x139, weight)
    out = jax.block_until_ready(out)

    # Sanity-check against a plain-JAX reference of the same math.
    ref = jnp.einsum(
        "nchw,oc->nohw", x134 * x139, weight.reshape(Cout, Cin)
    )
    assert out.shape == (N, Cout, H, W)
    assert jnp.allclose(out, ref, atol=1e-4, rtol=1e-4)

    print("KERNEL_OK")
</pallas_src>

<mosaic_0001>
module attributes {stable_mosaic.version = 11 : i64} {
  func.func @_mul_conv1x1_kernel(%arg0: i32, %arg1: memref<1x288xf32, #tpu.memory_space<vmem>>, %arg2: memref<48x288xf32, #tpu.memory_space<vmem>>, %arg3: memref<288x256xf32, #tpu.memory_space<vmem>>, %arg4: memref<48x256xf32, #tpu.memory_space<vmem>>) attributes {dimension_semantics = [#tpu.dimension_semantics<parallel>], iteration_bounds = array<i64: 1>, scalar_prefetch = 0 : i64, scratch_operands = 0 : i64, tpu.core_type = #tpu.core_type<tc>, window_params = [{pipeline_mode = #tpu.pipeline_mode<synchronous>, transform_indices = @transform_0, window_bounds = array<i64: 1, 288>}, {pipeline_mode = #tpu.pipeline_mode<synchronous>, transform_indices = @transform_1, window_bounds = array<i64: 48, 288>}, {transform_indices = @transform_2, window_bounds = array<i64: 288, 256>}, {transform_indices = @transform_3, window_bounds = array<i64: 48, 256>}]} {
    %c0 = arith.constant 0 : index
    %c0_0 = arith.constant 0 : index
    %0 = vector.load %arg2[%c0, %c0_0] : memref<48x288xf32, #tpu.memory_space<vmem>>, vector<48x288xf32>
    %c0_1 = arith.constant 0 : index
    %c0_2 = arith.constant 0 : index
    %1 = vector.load %arg1[%c0_1, %c0_2] : memref<1x288xf32, #tpu.memory_space<vmem>>, vector<1x288xf32>
    %2 = vector.broadcast %1 : vector<1x288xf32> to vector<48x288xf32>
    %3 = arith.mulf %0, %2 : vector<48x288xf32>
    %c0_3 = arith.constant 0 : index
    %c0_4 = arith.constant 0 : index
    %4 = vector.load %arg3[%c0_3, %c0_4] : memref<288x256xf32, #tpu.memory_space<vmem>>, vector<288x256xf32>
    %cst = arith.constant dense<0.000000e+00> : vector<48x256xf32>
    %5 = tpu.matmul %3, %4, %cst {dimension_numbers = #tpu.dot_dimension_numbers<[1], [0], [0], [1], [0, 0, 1, 1], [], []>} : vector<48x288xf32>, vector<288x256xf32>, vector<48x256xf32> -> vector<48x256xf32>
    %c0_5 = arith.constant 0 : index
    %c0_6 = arith.constant 0 : index
    %6 = vector.load %arg4[%c0_5, %c0_6] : memref<48x256xf32, #tpu.memory_space<vmem>>, vector<48x256xf32>
    tpu.vector_store %arg4[%c0_5, %c0_6], %5 {strides = array<i32>} : memref<48x256xf32, #tpu.memory_space<vmem>>, vector<48x256xf32>,
    return
  }
  func.func @transform_0(%arg0: i32) -> (i32, i32) {
    %c0_i32 = arith.constant 0 : i32
    %c0_i32_0 = arith.constant 0 : i32
    %c0_i32_1 = arith.constant 0 : i32
    return %c0_i32, %c0_i32_0 : i32, i32
  }
  func.func @transform_1(%arg0: i32) -> (i32, i32) {
    %c0_i32 = arith.constant 0 : i32
    %c0_i32_0 = arith.constant 0 : i32
    %c0_i32_1 = arith.constant 0 : i32
    return %c0_i32, %c0_i32_0 : i32, i32
  }
  func.func @transform_2(%arg0: i32) -> (i32, i32) {
    %c0_i32 = arith.constant 0 : i32
    %c0_i32_0 = arith.constant 0 : i32
    return %c0_i32, %arg0 : i32, i32
  }
  func.func @transform_3(%arg0: i32) -> (i32, i32) {
    %c0_i32 = arith.constant 0 : i32
    %c0_i32_0 = arith.constant 0 : i32
    return %c0_i32, %arg0 : i32, i32
  }
}

</mosaic_0001>

<llo_original>
// kernel: tpu_custom_call.1
$region0: #{tpu_custom_call.1}
  #allocation0 [shape = 'u32[]', space=smem, size = 0x4, offset = 0x4, fixed_abs, tag = 'smem constant byte address 0x4 - core index']
  #allocation1 [shape = 'u32[144,128]{1,0:T(1,128)}', space=vmem, size = 0x12000, scoped, tag = 'internal scratch']
  %s0 = inlined_call_operand.hbm [shape: f32[1,288], index: 0, kind: input, shape index: {}]
  %s1 = inlined_call_operand.hbm [shape: f32[48,288], index: 1, kind: input, shape index: {}]
  %s2 = inlined_call_operand.hbm [shape: f32[288,256], index: 2, kind: input, shape index: {}]
  %s3 = inlined_call_operand.hbm [shape: f32[48,256], index: 3, kind: output, shape index: {}]
  %s4 = sld [smem:[#allocation0]]
  $region34: #{tpu_custom_call.1} parent=0
    _
  %s6 = ssub.s32 1, %s4
  %s7 = scalar_select 0, %s6, %s4
  $region1: #{tpu_custom_call.1} parent=0
    #allocation2 [shape = 'u8[1536]{0}', space=vmem, size = 0x800, scoped, tag = 'input window, operand 0, single buffered']
    #allocation3 [shape = 's32[1]{0}', space=sflag, size = 0x4, scoped, tag = 'scoped memory for tpu_custom_call.1']
    #allocation4 [shape = 's32[1]{0}', space=sflag, size = 0x4, scoped, tag = 'scoped memory for tpu_custom_call.1']
    #allocation5 [shape = 'u8[73728]{0}', space=vmem, size = 0x12000, scoped, tag = 'input window, operand 1, single buffered']
    #allocation6 [shape = 's32[1]{0}', space=sflag, size = 0x4, scoped, tag = 'scoped memory for tpu_custom_call.1']
    #allocation7 [shape = 'u8[294912]{0}', space=vmem, size = 0x48000, scoped, tag = 'input window, operand 2, single buffered']
    #allocation8 [shape = 'u8[49152]{0}', space=vmem, size = 0xc000, scoped, tag = 'output window, operand 0, single buffered']
    %8 = vsyncpa [#allocation3], 0
    %9 = vsyncpa [#allocation6], 0
    %10 = vsyncpa [#allocation4], 0
    // Predicated region
    $region2: #{tpu_custom_call.1} parent=1 // pred_check
      _
    $region3: #{tpu_custom_call.1} parent=1 // pred_check_branch
      %12 = sbr.rel (0) target = $region5
    $region4: #{tpu_custom_call.1} parent=1 // pred_region
      %s14 = ssub.s32 48, 48
      %15 = vsyncadd [#allocation3], %s14
      %s17 = sshll.u32 [#allocation2], 4
      %s18 = int_to_ptr.vmem [resolvable:$true] %s17
      %20 = dma.hbm_to_vmem [thread:$0]  %s0, 48, %s18, [#allocation3]
    $region5: #{tpu_custom_call.1} parent=1 // pred_fallthru
      _
    // Predicated region
    $region6: #{tpu_custom_call.1} parent=1 // pred_check
      _
    $region7: #{tpu_custom_call.1} parent=1 // pred_check_branch
      %22 = sbr.rel (0) target = $region9
    $region8: #{tpu_custom_call.1} parent=1 // pred_region
      %s24 = ssub.s32 2304, 2304
      %25 = vsyncadd [#allocation6], %s24
      %s26 = sshll.u32 [#allocation5], 4
      %s27 = int_to_ptr.vmem [resolvable:$true] %s26
      %32 = dma.hbm_to_vmem [thread:$0]  %s1, 2304, %s27, [#allocation6], 384, 384, 24
    $region9: #{tpu_custom_call.1} parent=1 // pred_fallthru
      _
    // Predicated region
    $region10: #{tpu_custom_call.1} parent=1 // pred_check
      _
    $region11: #{tpu_custom_call.1} parent=1 // pred_check_branch
      %34 = sbr.rel (0) target = $region13
    $region12: #{tpu_custom_call.1} parent=1 // pred_region
      %s36 = ssub.s32 9216, 9216
      %37 = vsyncadd [#allocation6], %s36
      %s38 = sshll.u32 [#allocation7], 4
      %s39 = int_to_ptr.vmem [resolvable:$true] %s38
      %44 = dma.hbm_to_vmem [thread:$0]  %s2, 9216, %s39, [#allocation6], 256, 256, 16
    $region13: #{tpu_custom_call.1} parent=1 // pred_fallthru
      _
    // Predicated region
    $region14: #{tpu_custom_call.1} parent=1 // pred_check
      _
    $region15: #{tpu_custom_call.1} parent=1 // pred_check_branch
      %46 = sbr.rel (0) target = $region17
    $region16: #{tpu_custom_call.1} parent=1 // pred_region
      %47 = dma.done [#allocation3], 48
    $region17: #{tpu_custom_call.1} parent=1 // pred_fallthru
      _
    // Predicated region
    $region18: #{tpu_custom_call.1} parent=1 // pred_check
      _
    $region19: #{tpu_custom_call.1} parent=1 // pred_check_branch
      %49 = sbr.rel (0) target = $region21
    $region20: #{tpu_custom_call.1} parent=1 // pred_region
      %50 = dma.done [#allocation6], 2304
    $region21: #{tpu_custom_call.1} parent=1 // pred_fallthru
      _
    // Predicated region
    $region22: #{tpu_custom_call.1} parent=1 // pred_check
      _
    $region23: #{tpu_custom_call.1} parent=1 // pred_check_branch
      %52 = sbr.rel (0) target = $region25
    $region24: #{tpu_custom_call.1} parent=1 // pred_region
      %53 = dma.done [#allocation6], 9216
    $region25: #{tpu_custom_call.1} parent=1 // pred_fallthru
      _
    %v54 = vld [vmem:[#allocation5] sm:$0xff]
    %v55 = vld [vmem:[#allocation5 + $0x8] sm:$0xff]
    %v56 = vld [vmem:[#allocation5 + $0x10] sm:$0xff]
    %v57 = vld [vmem:[#allocation5 + $0x18] sm:$0xff]
    %v58 = vld [vmem:[#allocation5 + $0x20] sm:$0xff]
    %v59 = vld [vmem:[#allocation5 + $0x28] sm:$0xff]
    %v60 = vld [vmem:[#allocation5 + $0x30] sm:$0xff]
    %v61 = vld [vmem:[#allocation5 + $0x38] sm:$0xff]
    %v62 = vld [vmem:[#allocation5 + $0x40] sm:$0xff]
    %v63 = vld [vmem:[#allocation5 + $0x48] sm:$0xff]
    %v64 = vld [vmem:[#allocation5 + $0x50] sm:$0xff]
    %v65 = vld [vmem:[#allocation5 + $0x58] sm:$0xff]
    %v66 = vld [vmem:[#allocation5 + $0x60] sm:$0xff]
    %v67 = vld [vmem:[#allocation5 + $0x68] sm:$0xff]
    %v68 = vld [vmem:[#allocation5 + $0x70] sm:$0xff]
    %v69 = vld [vmem:[#allocation5 + $0x78] sm:$0xff]
    %v70 = vld [vmem:[#allocation5 + $0x80] sm:$0xff]
    %v71 = vld [vmem:[#allocation5 + $0x88] sm:$0xff]
    %v72 = vld [vmem:[#allocation2] sm:$0x7]
    %v74 = vlaneseq
    %v75 = vshrl.u32 %v74, 7
    %v76 = vsub.s32 0, %v75
    %v77 = vrot.slane %v72, %v76
    %v78 = vlaneseq
    %v79 = vshrl.u32 %v78, 7
    %v80 = vsub.s32 1, %v79
    %v81 = vrot.slane %v72, %v80
    %v82 = vlaneseq
    %v83 = vshrl.u32 %v82, 7
    %v84 = vsub.s32 2, %v83
    %v85 = vrot.slane %v72, %v84
    %v89 = vmul.f32 %v54, %v77
    %v90 = vmul.f32 %v55, %v81
    %v91 = vmul.f32 %v56, %v85
    %v92 = vmul.f32 %v57, %v77
    %v93 = vmul.f32 %v58, %v81
    %v94 = vmul.f32 %v59, %v85
    %v95 = vmul.f32 %v60, %v77
    %v96 = vmul.f32 %v61, %v81
    %v97 = vmul.f32 %v62, %v85
    %v98 = vmul.f32 %v63, %v77
    %v99 = vmul.f32 %v64, %v81
    %v100 = vmul.f32 %v65, %v85
    %v101 = vmul.f32 %v66, %v77
    %v102 = vmul.f32 %v67, %v81
    %v103 = vmul.f32 %v68, %v85
    %v104 = vmul.f32 %v69, %v77
    %v105 = vmul.f32 %v70, %v81
    %v106 = vmul.f32 %v71, %v85
    %v107 = vld [vmem:[#allocation7] sm:$0xff]
    %v108 = vld [vmem:[#allocation7 + $0x8] sm:$0xff]
    %v109 = vld [vmem:[#allocation7 + $0x10] sm:$0xff]
    %v110 = vld [vmem:[#allocation7 + $0x18] sm:$0xff]
    %v111 = vld [vmem:[#allocation7 + $0x20] sm:$0xff]
    %v112 = vld [vmem:[#allocation7 + $0x28] sm:$0xff]
    %v113 = vld [vmem:[#allocation7 + $0x30] sm:$0xff]
    %v114 = vld [vmem:[#allocation7 + $0x38] sm:$0xff]
    %v115 = vld [vmem:[#allocation7 + $0x40] sm:$0xff]
    %v116 = vld [vmem:[#allocation7 + $0x48] sm:$0xff]
    %v117 = vld [vmem:[#allocation7 + $0x50] sm:$0xff]
    %v118 = vld [vmem:[#allocation7 + $0x58] sm:$0xff]
    %v119 = vld [vmem:[#allocation7 + $0x60] sm:$0xff]
    %v120 = vld [vmem:[#allocation7 + $0x68] sm:$0xff]
    %v121 = vld [vmem:[#allocation7 + $0x70] sm:$0xff]
    %v122 = vld [vmem:[#allocation7 + $0x78] sm:$0xff]
    %v123 = vld [vmem:[#allocation7 + $0x80] sm:$0xff]
    %v124 = vld [vmem:[#allocation7 + $0x88] sm:$0xff]
    %v125 = vld [vmem:[#allocation7 + $0x90] sm:$0xff]
    %v126 = vld [vmem:[#allocation7 + $0x98] sm:$0xff]
    %v127 = vld [vmem:[#allocation7 + $0xa0] sm:$0xff]
    %v128 = vld [vmem:[#allocation7 + $0xa8] sm:$0xff]
    %v129 = vld [vmem:[#allocation7 + $0xb0] sm:$0xff]
    %v130 = vld [vmem:[#allocation7 + $0xb8] sm:$0xff]
    %v131 = vld [vmem:[#allocation7 + $0xc0] sm:$0xff]
    %v132 = vld [vmem:[#allocation7 + $0xc8] sm:$0xff]
    %v133 = vld [vmem:[#allocation7 + $0xd0] sm:$0xff]
    %v134 = vld [vmem:[#allocation7 + $0xd8] sm:$0xff]
    %v135 = vld [vmem:[#allocation7 + $0xe0] sm:$0xff]
    %v136 = vld [vmem:[#allocation7 + $0xe8] sm:$0xff]
    %v137 = vld [vmem:[#allocation7 + $0xf0] sm:$0xff]
    %v138 = vld [vmem:[#allocation7 + $0xf8] sm:$0xff]
    %v139 = vld [vmem:[#allocation7 + $0x100] sm:$0xff]
    %v140 = vld [vmem:[#allocation7 + $0x108] sm:$0xff]
    %v141 = vld [vmem:[#allocation7 + $0x110] sm:$0xff]
    %v142 = vld [vmem:[#allocation7 + $0x118] sm:$0xff]
    %v143 = vld [vmem:[#allocation7 + $0x120] sm:$0xff]
    %v144 = vld [vmem:[#allocation7 + $0x128] sm:$0xff]
    %v145 = vld [vmem:[#allocation7 + $0x130] sm:$0xff]
    %v146 = vld [vmem:[#allocation7 + $0x138] sm:$0xff]
    %v147 = vld [vmem:[#allocation7 + $0x140] sm:$0xff]
    %v148 = vld [vmem:[#allocation7 + $0x148] sm:$0xff]
    %v149 = vld [vmem:[#allocation7 + $0x150] sm:$0xff]
    %v150 = vld [vmem:[#allocation7 + $0x158] sm:$0xff]
    %v151 = vld [vmem:[#allocation7 + $0x160] sm:$0xff]
    %v152 = vld [vmem:[#allocation7 + $0x168] sm:$0xff]
    %v153 = vld [vmem:[#allocation7 + $0x170] sm:$0xff]
    %v154 = vld [vmem:[#allocation7 + $0x178] sm:$0xff]
    %v155 = vld [vmem:[#allocation7 + $0x180] sm:$0xff]
    %v156 = vld [vmem:[#allocation7 + $0x188] sm:$0xff]
    %v157 = vld [vmem:[#allocation7 + $0x190] sm:$0xff]
    %v158 = vld [vmem:[#allocation7 + $0x198] sm:$0xff]
    %v159 = vld [vmem:[#allocation7 + $0x1a0] sm:$0xff]
    %v160 = vld [vmem:[#allocation7 + $0x1a8] sm:$0xff]
    %v161 = vld [vmem:[#allocation7 + $0x1b0] sm:$0xff]
    %v162 = vld [vmem:[#allocation7 + $0x1b8] sm:$0xff]
    %v163 = vld [vmem:[#allocation7 + $0x1c0] sm:$0xff]
    %v164 = vld [vmem:[#allocation7 + $0x1c8] sm:$0xff]
    %v165 = vld [vmem:[#allocation7 + $0x1d0] sm:$0xff]
    %v166 = vld [vmem:[#allocation7 + $0x1d8] sm:$0xff]
    %v167 = vld [vmem:[#allocation7 + $0x1e0] sm:$0xff]
    %v168 = vld [vmem:[#allocation7 + $0x1e8] sm:$0xff]
    %v169 = vld [vmem:[#allocation7 + $0x1f0] sm:$0xff]
    %v170 = vld [vmem:[#allocation7 + $0x1f8] sm:$0xff]
    %v171 = vld [vmem:[#allocation7 + $0x200] sm:$0xff]
    %v172 = vld [vmem:[#allocation7 + $0x208] sm:$0xff]
    %v173 = vld [vmem:[#allocation7 + $0x210] sm:$0xff]
    %v174 = vld [vmem:[#allocation7 + $0x218] sm:$0xff]
    %v175 = vld [vmem:[#allocation7 + $0x220] sm:$0xff]
    %v176 = vld [vmem:[#allocation7 + $0x228] sm:$0xff]
    %v177 = vld [vmem:[#allocation7 + $0x230] sm:$0xff]
    %v178 = vld [vmem:[#allocation7 + $0x238] sm:$0xff]
    %vm179 = vcmask 261120
    %v181 = vsel %vm179, %v91, 0
    %v184 = vsel %vm179, %v94, 0
    %v187 = vsel %vm179, %v97, 0
    %v190 = vsel %vm179, %v100, 0
    %v193 = vsel %vm179, %v103, 0
    %v196 = vsel %vm179, %v106, 0
    %198 = vmatprep.subr.mxu0 %v108
    %199 = vmatpush1.msra.mxu0 %v107
    %200 = vmatprep.subr.mxu0 %v110
    %201 = vmatpush1.msra.mxu0 %v109
    %202 = vmatprep.subr.mxu0 %v112
    %203 = vmatpush1.msra.mxu0 %v111
    %204 = vmatprep.subr.mxu0 %v114
    %205 = vmatpush1.msra.mxu0 %v113
    %206 = vmatprep.subr.mxu0 %v116
    %207 = vmatpush1.msra.mxu0 %v115
    %208 = vmatprep.subr.mxu0 %v118
    %209 = vmatpush1.msra.mxu0 %v117
    %210 = vmatprep.subr.mxu0 %v120
    %211 = vmatpush1.msra.mxu0 %v119
    %212 = vmatprep.subr.mxu0 %v122
    %213 = vmatpush1.msra.mxu0 %v121
    %214 = vmatprep.subr.mxu0 %v124
    %215 = vmatpush1.msra.mxu0 %v123
    %216 = vmatprep.subr.mxu0 %v126
    %217 = vmatpush1.msra.mxu0 %v125
    %218 = vmatprep.subr.mxu0 %v128
    %219 = vmatpush1.msra.mxu0 %v127
    %220 = vmatprep.subr.mxu0 %v130
    %221 = vmatpush1.msra.mxu0 %v129
    %222 = vmatprep.subr.mxu0 %v132
    %223 = vmatpush1.msra.mxu0 %v131
    %224 = vmatprep.subr.mxu0 %v134
    %225 = vmatpush1.msra.mxu0 %v133
    %226 = vmatprep.subr.mxu0 %v136
    %227 = vmatpush1.msra.mxu0 %v135
    %228 = vmatprep.subr.mxu0 %v138
    %229 = vmatpush1.msra.mxu0 %v137
    %230 = vmatprep.subr.mxu0 %v140
    %231 = vmatpush1.msra.mxu0 %v139
    %232 = vmatprep.subr.mxu0 %v142
    %233 = vmatpush1.msra.mxu0 %v141
    %234 = vmatprep.subr.mxu0 %v144
    %235 = vmatpush1.msra.mxu0 %v143
    %236 = vmatprep.subr.mxu0 %v146
    %237 = vmatpush1.msra.mxu0 %v145
    %238 = vmatprep.subr.mxu0 %v148
    %239 = vmatpush1.msra.mxu0 %v147
    %240 = vmatprep.subr.mxu0 %v150
    %241 = vmatpush1.msra.mxu0 %v149
    %242 = vmatprep.subr.mxu0 %v152
    %243 = vmatpush1.msra.mxu0 %v151
    %244 = vmatprep.subr.mxu0 %v154
    %245 = vmatpush1.msra.mxu0 %v153
    %246 = vmatprep.subr.mxu0 %v156
    %247 = vmatpush1.msra.mxu0 %v155
    %248 = vmatprep.subr.mxu0 %v158
    %249 = vmatpush1.msra.mxu0 %v157
    %250 = vmatprep.subr.mxu0 %v160
    %251 = vmatpush1.msra.mxu0 %v159
    %252 = vmatprep.subr.mxu0 %v162
    %253 = vmatpush1.msra.mxu0 %v161
    %254 = vmatprep.subr.mxu0 %v164
    %255 = vmatpush1.msra.mxu0 %v163
    %256 = vmatprep.subr.mxu0 %v166
    %257 = vmatpush1.msra.mxu0 %v165
    %258 = vmatprep.subr.mxu0 %v168
    %259 = vmatpush1.msra.mxu0 %v167
    %260 = vmatprep.subr.mxu0 %v170
    %261 = vmatpush1.msra.mxu0 %v169
    %262 = vmatprep.mubr.f32.mxu0 %v90
    %263 = vmatmul.mubr.f32.gmra.mrb[0].mxu0 %v89
    %v264 = vpop.f32.mrb[0].mxu0
    %v265 = vadd.f32 0.0, %v264
    %v266 = vpop.f32.mrb[0].mxu0
    %v267 = vadd.f32 0.0, %v266
    %268 = vmatprep.mubr.f32.mxu0 %v93
    %269 = vmatmul.mubr.f32.gmra.mrb[0].mxu0 %v92
    %v270 = vpop.f32.mrb[0].mxu0
    %v271 = vadd.f32 0.0, %v270
    %v272 = vpop.f32.mrb[0].mxu0
    %v273 = vadd.f32 0.0, %v272
    %274 = vmatprep.mubr.f32.mxu0 %v96
    %275 = vmatmul.mubr.f32.gmra.mrb[0].mxu0 %v95
    %v276 = vpop.f32.mrb[0].mxu0
    %v277 = vadd.f32 0.0, %v276
    %v278 = vpop.f32.mrb[0].mxu0
    %v279 = vadd.f32 0.0, %v278
    %280 = vmatprep.mubr.f32.mxu0 %v99
    %281 = vmatmul.mubr.f32.gmra.mrb[0].mxu0 %v98
    %v282 = vpop.f32.mrb[0].mxu0
    %v283 = vadd.f32 0.0, %v282
    %v284 = vpop.f32.mrb[0].mxu0
    %v285 = vadd.f32 0.0, %v284
    %286 = vmatprep.mubr.f32.mxu0 %v102
    %287 = vmatmul.mubr.f32.gmra.mrb[0].mxu0 %v101
    %v288 = vpop.f32.mrb[0].mxu0
    %v289 = vadd.f32 0.0, %v288
    %v290 = vpop.f32.mrb[0].mxu0
    %v291 = vadd.f32 0.0, %v290
    %292 = vmatprep.mubr.f32.mxu0 %v105
    %293 = vmatmul.mubr.f32.gmra.mrb[0].mxu0 %v104
    %v294 = vpop.f32.mrb[0].mxu0
    %v295 = vadd.f32 0.0, %v294
    %v296 = vpop.f32.mrb[0].mxu0
    %v297 = vadd.f32 0.0, %v296
    %298 = vdwg.mxu0
    %299 = vmatprep.subr.mxu0 %v172
    %300 = vmatpush1.msra.mxu0 %v171
    %301 = vmatprep.subr.mxu0 %v174
    %302 = vmatpush1.msra.mxu0 %v173
    %303 = vmatprep.subr.mxu0 %v176
    %304 = vmatpush1.msra.mxu0 %v175
    %305 = vmatprep.subr.mxu0 %v178
    %306 = vmatpush1.msra.mxu0 %v177
    %307 = vmatprep.subr.mxu0 0.0
    %308 = vmatpush1.msra.mxu0 0.0
    %309 = vmatprep.subr.mxu0 0.0
    %310 = vmatpush1.msra.mxu0 0.0
    %311 = vmatprep.subr.mxu0 0.0
    %312 = vmatpush1.msra.mxu0 0.0
    %313 = vmatprep.subr.mxu0 0.0
    %314 = vmatpush1.msra.mxu0 0.0
    %315 = vmatprep.subr.mxu0 0.0
    %316 = vmatpush1.msra.mxu0 0.0
    %317 = vmatprep.subr.mxu0 0.0
    %318 = vmatpush1.msra.mxu0 0.0
    %319 = vmatprep.subr.mxu0 0.0
    %320 = vmatpush1.msra.mxu0 0.0
    %321 = vmatprep.subr.mxu0 0.0
    %322 = vmatpush1.msra.mxu0 0.0
    %323 = vmatprep.subr.mxu0 0.0
    %324 = vmatpush1.msra.mxu0 0.0
    %325 = vmatprep.subr.mxu0 0.0
    %326 = vmatpush1.msra.mxu0 0.0
    %327 = vmatprep.subr.mxu0 0.0
    %328 = vmatpush1.msra.mxu0 0.0
    %329 = vmatprep.subr.mxu0 0.0
    %330 = vmatpush1.msra.mxu0 0.0
    %331 = vmatprep.subr.mxu0 0.0
    %332 = vmatpush1.msra.mxu0 0.0
    %333 = vmatprep.subr.mxu0 0.0
    %334 = vmatpush1.msra.mxu0 0.0
    %335 = vmatprep.subr.mxu0 0.0
    %336 = vmatpush1.msra.mxu0 0.0
    %337 = vmatprep.subr.mxu0 0.0
    %338 = vmatpush1.msra.mxu0 0.0
    %339 = vmatprep.subr.mxu0 0.0
    %340 = vmatpush1.msra.mxu0 0.0
    %341 = vmatprep.subr.mxu0 0.0
    %342 = vmatpush1.msra.mxu0 0.0
    %343 = vmatprep.subr.mxu0 0.0
    %344 = vmatpush1.msra.mxu0 0.0
    %345 = vmatprep.subr.mxu0 0.0
    %346 = vmatpush1.msra.mxu0 0.0
    %347 = vmatprep.subr.mxu0 0.0
    %348 = vmatpush1.msra.mxu0 0.0
    %349 = vmatprep.subr.mxu0 0.0
    %350 = vmatpush1.msra.mxu0 0.0
    %351 = vmatprep.subr.mxu0 0.0
    %352 = vmatpush1.msra.mxu0 0.0
    %353 = vmatprep.subr.mxu0 0.0
    %354 = vmatpush1.msra.mxu0 0.0
    %355 = vmatprep.subr.mxu0 0.0
    %356 = vmatpush1.msra.mxu0 0.0
    %357 = vmatprep.subr.mxu0 0.0
    %358 = vmatpush1.msra.mxu0 0.0
    %359 = vmatprep.subr.mxu0 0.0
    %360 = vmatpush1.msra.mxu0 0.0
    %361 = vmatprep.subr.mxu0 0.0
    %362 = vmatpush1.msra.mxu0 0.0
    %363 = vmatprep.mubr.f32.mxu0 0.0
    %364 = vmatmul.mubr.f32.gmra.mrb[0].mxu0 %v181
    %v365 = vpop.f32.mrb[0].mxu0
    %v366 = vadd.f32 %v265, %v365
    %v367 = vpop.f32.mrb[0].mxu0
    %v368 = vadd.f32 %v267, %v367
    %369 = vmatprep.mubr.f32.mxu0 0.0
    %370 = vmatmul.mubr.f32.gmra.mrb[0].mxu0 %v184
    %v371 = vpop.f32.mrb[0].mxu0
    %v372 = vadd.f32 %v271, %v371
    %v373 = vpop.f32.mrb[0].mxu0
    %v374 = vadd.f32 %v273, %v373
    %375 = vmatprep.mubr.f32.mxu0 0.0
    %376 = vmatmul.mubr.f32.gmra.mrb[0].mxu0 %v187
    %v377 = vpop.f32.mrb[0].mxu0
    %v378 = vadd.f32 %v277, %v377
    %v379 = vpop.f32.mrb[0].mxu0
    %v380 = vadd.f32 %v279, %v379
    %381 = vmatprep.mubr.f32.mxu0 0.0
    %382 = vmatmul.mubr.f32.gmra.mrb[0].mxu0 %v190
    %v383 = vpop.f32.mrb[0].mxu0
    %v384 = vadd.f32 %v283, %v383
    %v385 = vpop.f32.mrb[0].mxu0
    %v386 = vadd.f32 %v285, %v385
    %387 = vmatprep.mubr.f32.mxu0 0.0
    %388 = vmatmul.mubr.f32.gmra.mrb[0].mxu0 %v193
    %v389 = vpop.f32.mrb[0].mxu0
    %v390 = vadd.f32 %v289, %v389
    %v391 = vpop.f32.mrb[0].mxu0
    %v392 = vadd.f32 %v291, %v391
    %393 = vmatprep.mubr.f32.mxu0 0.0
    %394 = vmatmul.mubr.f32.gmra.mrb[0].mxu0 %v196
    %v395 = vpop.f32.mrb[0].mxu0
    %v396 = vadd.f32 %v295, %v395
    %v397 = vpop.f32.mrb[0].mxu0
    %v398 = vadd.f32 %v297, %v397
    %399 = vdwg.mxu0
    %400 = vst [vmem:[#allocation8] sm:$0xff] %v366
    %401 = vst [vmem:[#allocation8 + $0x8] sm:$0xff] %v368
    %402 = vst [vmem:[#allocation8 + $0x10] sm:$0xff] %v372
    %403 = vst [vmem:[#allocation8 + $0x18] sm:$0xff] %v374
    %404 = vst [vmem:[#allocation8 + $0x20] sm:$0xff] %v378
    %405 = vst [vmem:[#allocation8 + $0x28] sm:$0xff] %v380
    %406 = vst [vmem:[#allocation8 + $0x30] sm:$0xff] %v384
    %407 = vst [vmem:[#allocation8 + $0x38] sm:$0xff] %v386
    %408 = vst [vmem:[#allocation8 + $0x40] sm:$0xff] %v390
    %409 = vst [vmem:[#allocation8 + $0x48] sm:$0xff] %v392
    %410 = vst [vmem:[#allocation8 + $0x50] sm:$0xff] %v396
    %411 = vst [vmem:[#allocation8 + $0x58] sm:$0xff] %v398
    // Predicated region
    $region26: #{tpu_custom_call.1} parent=1 // pred_check
      _
    $region27: #{tpu_custom_call.1} parent=1 // pred_check_branch
      %413 = sbr.rel (0) target = $region29
    $region28: #{tpu_custom_call.1} parent=1 // pred_region
      %s415 = ssub.s32 1536, 1536
      %416 = vsyncadd [#allocation4], %s415
      %s417 = sshll.u32 [#allocation8], 4
      %s418 = int_to_ptr.vmem [resolvable:$true] %s417
      %423 = dma.vmem_to_hbm [thread:$0]  %s418, 1536, %s3, [#allocation4], 256, 256, 16
    $region29: #{tpu_custom_call.1} parent=1 // pred_fallthru
      _
    // Predicated region
    $region30: #{tpu_custom_call.1} parent=1 // pred_check
      _
    $region31: #{tpu_custom_call.1} parent=1 // pred_check_branch
      %425 = sbr.rel (0) target = $region33
    $region32: #{tpu_custom_call.1} parent=1 // pred_region
      %426 = dma.done [#allocation4], 1536
    $region33: #{tpu_custom_call.1} parent=1 // pred_fallthru
      _
    %427 = vsyncpa [#allocation3], 1
    %428 = vsyncpa [#allocation6], 1
    %429 = vsyncpa [#allocation4], 1

</llo_original>
